<compile_context>
chip_gen: v7x
topology: tpu7x:2x2x1
jax: 0.10.0
libtpu: 0.0.40
codegen_flags: <defaults>
</compile_context>

<pallas_src>
import jax
import jax.numpy as jnp
from jax.experimental import pallas as pl
from jax.experimental.pallas import tpu as pltpu


def _nsp_head_kernel(x_ref, w_ref, b_ref, o_ref):
    # One batch tile per grid step: MXU matmul with f32 accumulation, then a
    # single VPU bias add.
    o_ref[...] = (
        jnp.dot(x_ref[...], w_ref[...], preferred_element_type=jnp.float32)
        + b_ref[...].astype(jnp.float32)
    ).astype(o_ref.dtype)


def _vmem_capacity_bytes():
    try:
        return int(pltpu.get_tpu_info().vmem_capacity_bytes)
    except Exception:
        return 64 << 20  # conservative (v7x per-TC VMEM)


def _round_up(x, m):
    return ((x + m - 1) // m) * m


def _round_down(x, m):
    return (x // m) * m


def _choose_batch_tile(B, H, itemsize, vmem_cap):
    """Batch tile: dtype-aware row alignment, chip-aware VMEM cap, >=2 grid
    steps when the batch is big enough (so v7x megacore sharding has work)."""
    row_align = max(8, 32 // itemsize)  # 8 rows f32, 16 bf16, 32 int8
    if B <= row_align:
        return B  # single full-extent block (block == full array dims)
    # Per-buffer cap: ~16 MiB on 128 MiB chips (v5e/v6e), ~8 MiB on 64 MiB v7x.
    cap_bytes = min(16 << 20, max(1 << 20, vmem_cap // 8))
    cap_rows = max(row_align, _round_down(cap_bytes // max(1, H * itemsize), row_align))
    tb = min(_round_up(B, row_align), cap_rows)
    # Force at least 2 grid steps so both v7x TensorCores participate.
    if B >= 2 * row_align:
        tb = min(tb, _round_up(pl.cdiv(B, 2), row_align))
    return max(row_align, _round_down(tb, row_align))


def bert_only_nsp_head(pooled_output, weight, bias, *, batch_tile=None,
                       force_pallas=False):
    """pooled_output: [B, H]; weight: [2, H] (PyTorch nn.Linear layout); bias: [2]."""
    B, H = pooled_output.shape
    out_dtype = pooled_output.dtype
    itemsize = jnp.dtype(pooled_output.dtype).itemsize

    # Small-problem fallback: at tiny sizes a standalone kernel is pure launch
    # overhead plus an extra [B, H] HBM round-trip — let XLA fuse it instead.
    if not force_pallas and B * H * itemsize < (256 << 10):
        return (pooled_output @ weight.T + bias).astype(out_dtype)

    w_t = weight.T            # [H, 2] — glue transpose in plain JAX
    b2d = bias.reshape(1, 2)  # [1, 2] for broadcasting inside the kernel

    vmem_cap = _vmem_capacity_bytes()
    tb = batch_tile if batch_tile is not None else _choose_batch_tile(
        B, H, itemsize, vmem_cap)

    # cdiv grid with a padded batch instead of shrinking tb to a divisor of B.
    B_pad = _round_up(B, tb)
    x = pooled_output
    if B_pad != B:
        x = jnp.pad(pooled_output, ((0, B_pad - B), (0, 0)))
    grid = (B_pad // tb,)
    assert tb == B_pad or tb % 8 == 0, (
        f"batch tile {tb} must be a multiple of 8 (or equal the padded batch)")

    w_bytes = H * 2 * jnp.dtype(w_t.dtype).itemsize
    out_itemsize = jnp.dtype(out_dtype).itemsize

    # VMEM budget: double-buffered x tile + double-buffered out tile +
    # resident weight/bias + compiler-scratch headroom; clamp below physical.
    vmem_bytes = (
        2 * tb * H * itemsize
        + 2 * tb * 2 * out_itemsize
        + w_bytes + 2 * jnp.dtype(bias.dtype).itemsize
        + (4 << 20)
    )
    vmem_bytes = int(min(max(vmem_bytes, 4 << 20), vmem_cap - (8 << 20)))

    cost = pl.CostEstimate(
        flops=4 * B_pad * H,
        transcendentals=0,
        bytes_accessed=B_pad * H * itemsize + w_bytes + B_pad * 2 * out_itemsize,
    )

    out = pl.pallas_call(
        _nsp_head_kernel,
        out_shape=jax.ShapeDtypeStruct((B_pad, 2), out_dtype),
        grid=grid,
        in_specs=[
            pl.BlockSpec((tb, H), lambda i: (i, 0)),   # stream x over batch
            pl.BlockSpec((H, 2), lambda i: (0, 0)),    # weight stays resident
            pl.BlockSpec((1, 2), lambda i: (0, 0)),    # bias stays resident
        ],
        out_specs=pl.BlockSpec((tb, 2), lambda i: (i, 0)),
        compiler_params=pltpu.CompilerParams(
            dimension_semantics=("parallel",),
            vmem_limit_bytes=vmem_bytes,
        ),
        cost_estimate=cost,
    )(x, w_t, b2d)
    return out[:B] if B_pad != B else out


if __name__ == "__main__":
    key = jax.random.PRNGKey(0)
    k_x, k_w, k_b, k_x2, k_x3 = jax.random.split(key, 5)

    # --- Module-consistent small shape: batch=2, hidden_size=32 (f32). ---
    # (force_pallas=True so the kernel itself is exercised at the test shape;
    #  the production wrapper would route this to plain XLA.)
    B, H = 2, 32
    pooled_output = jax.random.normal(k_x, (B, H), dtype=jnp.float32)
    weight = jax.random.normal(k_w, (2, H), dtype=jnp.float32) * 0.02  # nn.Linear [2, H]
    bias = jax.random.normal(k_b, (2,), dtype=jnp.float32) * 0.02

    out = bert_only_nsp_head(pooled_output, weight, bias, force_pallas=True)
    out = jax.block_until_ready(out)
    ref = pooled_output @ weight.T + bias
    assert out.shape == (B, 2)
    assert jnp.allclose(out, ref, atol=1e-5, rtol=1e-5)

    # --- Multi-step grid with a non-divisible (padded) batch, f32. ---
    B2, H2 = 200, 128                      # 200 % 64 != 0 -> cdiv grid of 4 with padding
    x2 = jax.random.normal(k_x2, (B2, H2), dtype=jnp.float32)
    w2 = jax.random.normal(k_w, (2, H2), dtype=jnp.float32) * 0.02
    b2 = jax.random.normal(k_b, (2,), dtype=jnp.float32) * 0.02
    out2 = bert_only_nsp_head(x2, w2, b2, batch_tile=64, force_pallas=True)
    out2 = jax.block_until_ready(out2)
    ref2 = x2 @ w2.T + b2
    assert out2.shape == (B2, 2)
    assert jnp.allclose(out2, ref2, atol=1e-4, rtol=1e-4)

    # --- bf16 streaming path (halved HBM traffic; dtype-aware auto tiling). ---
    B3, H3 = 256, 128
    x3 = jax.random.normal(k_x3, (B3, H3), dtype=jnp.float32).astype(jnp.bfloat16)
    w3 = (jax.random.normal(k_w, (2, H3), dtype=jnp.float32) * 0.02).astype(jnp.bfloat16)
    b3 = (jax.random.normal(k_b, (2,), dtype=jnp.float32) * 0.02).astype(jnp.bfloat16)
    out3 = bert_only_nsp_head(x3, w3, b3, force_pallas=True)
    out3 = jax.block_until_ready(out3)
    ref3 = (x3.astype(jnp.float32) @ w3.astype(jnp.float32).T
            + b3.astype(jnp.float32)).astype(jnp.bfloat16)
    assert out3.shape == (B3, 2)
    assert jnp.allclose(out3.astype(jnp.float32), ref3.astype(jnp.float32),
                        atol=2e-2, rtol=2e-2)

    print("KERNEL_OK")
</pallas_src>

<mosaic_0001>
module attributes {stable_mosaic.version = 11 : i64} {
  func.func @_nsp_head_kernel(%arg0: i32, %arg1: memref<2x32xf32, #tpu.memory_space<vmem>>, %arg2: memref<32x2xf32, #tpu.memory_space<vmem>>, %arg3: memref<1x2xf32, #tpu.memory_space<vmem>>, %arg4: memref<2x2xf32, #tpu.memory_space<vmem>>) attributes {dimension_semantics = [#tpu.dimension_semantics<parallel>], iteration_bounds = array<i64: 1>, scalar_prefetch = 0 : i64, scratch_operands = 0 : i64, tpu.core_type = #tpu.core_type<tc>, window_params = [{transform_indices = @transform_0, window_bounds = array<i64: 2, 32>}, {pipeline_mode = #tpu.pipeline_mode<synchronous>, transform_indices = @transform_1, window_bounds = array<i64: 32, 2>}, {pipeline_mode = #tpu.pipeline_mode<synchronous>, transform_indices = @transform_2, window_bounds = array<i64: 1, 2>}, {transform_indices = @transform_3, window_bounds = array<i64: 2, 2>}]} {
    %c0 = arith.constant 0 : index
    %c0_0 = arith.constant 0 : index
    %0 = vector.load %arg1[%c0, %c0_0] : memref<2x32xf32, #tpu.memory_space<vmem>>, vector<2x32xf32>
    %c0_1 = arith.constant 0 : index
    %c0_2 = arith.constant 0 : index
    %1 = vector.load %arg2[%c0_1, %c0_2] : memref<32x2xf32, #tpu.memory_space<vmem>>, vector<32x2xf32>
    %cst = arith.constant dense<0.000000e+00> : vector<2x2xf32>
    %2 = tpu.matmul %0, %1, %cst {dimension_numbers = #tpu.dot_dimension_numbers<[1], [0], [0], [1], [0, 0, 1, 1], [], []>} : vector<2x32xf32>, vector<32x2xf32>, vector<2x2xf32> -> vector<2x2xf32>
    %c0_3 = arith.constant 0 : index
    %c0_4 = arith.constant 0 : index
    %3 = vector.load %arg3[%c0_3, %c0_4] : memref<1x2xf32, #tpu.memory_space<vmem>>, vector<1x2xf32>
    %4 = vector.broadcast %3 : vector<1x2xf32> to vector<2x2xf32>
    %5 = arith.addf %2, %4 : vector<2x2xf32>
    %c0_5 = arith.constant 0 : index
    %c0_6 = arith.constant 0 : index
    %6 = vector.load %arg4[%c0_5, %c0_6] : memref<2x2xf32, #tpu.memory_space<vmem>>, vector<2x2xf32>
    tpu.vector_store %arg4[%c0_5, %c0_6], %5 {strides = array<i32>} : memref<2x2xf32, #tpu.memory_space<vmem>>, vector<2x2xf32>,
    return
  }
  func.func @transform_0(%arg0: i32) -> (i32, i32) {
    %c0_i32 = arith.constant 0 : i32
    %c0_i32_0 = arith.constant 0 : i32
    return %arg0, %c0_i32 : i32, i32
  }
  func.func @transform_1(%arg0: i32) -> (i32, i32) {
    %c0_i32 = arith.constant 0 : i32
    %c0_i32_0 = arith.constant 0 : i32
    %c0_i32_1 = arith.constant 0 : i32
    return %c0_i32, %c0_i32_0 : i32, i32
  }
  func.func @transform_2(%arg0: i32) -> (i32, i32) {
    %c0_i32 = arith.constant 0 : i32
    %c0_i32_0 = arith.constant 0 : i32
    %c0_i32_1 = arith.constant 0 : i32
    return %c0_i32, %c0_i32_0 : i32, i32
  }
  func.func @transform_3(%arg0: i32) -> (i32, i32) {
    %c0_i32 = arith.constant 0 : i32
    %c0_i32_0 = arith.constant 0 : i32
    return %arg0, %c0_i32 : i32, i32
  }
}

</mosaic_0001>

<llo_original>
// kernel: tpu_custom_call.1
$region0: #{tpu_custom_call.1}
  #allocation0 [shape = 'u32[]', space=smem, size = 0x4, offset = 0x4, fixed_abs, tag = 'smem constant byte address 0x4 - core index']
  #allocation1 [shape = 'u32[144,128]{1,0:T(1,128)}', space=vmem, size = 0x12000, scoped, tag = 'internal scratch']
  %s0 = inlined_call_operand.vmem [shape: f32[2,32], index: 0, kind: input, shape index: {}]
  %s1 = inlined_call_operand.vmem [shape: f32[32,2], index: 1, kind: input, shape index: {}]
  %s2 = inlined_call_operand.vmem [shape: f32[1,2], index: 2, kind: input, shape index: {}]
  %s3 = inlined_call_operand.hbm [shape: f32[2,2], index: 3, kind: output, shape index: {}]
  %s4 = sld [smem:[#allocation0]]
  $region22: #{tpu_custom_call.1} parent=0
    _
  %s6 = ssub.s32 1, %s4
  %s7 = scalar_select 0, %s6, %s4
  $region1: #{tpu_custom_call.1} parent=0
    #allocation2 [shape = 'u8[1024]{0}', space=vmem, size = 0x400, scoped, tag = 'output window, operand 0, single buffered']
    #allocation3 [shape = 's32[1]{0}', space=sflag, size = 0x4, scoped, tag = 'scoped memory for tpu_custom_call.1']
    %8 = vsyncpa [#allocation3], 0
    // Predicated region
    $region2: #{tpu_custom_call.1} parent=1 // pred_check
      _
    $region3: #{tpu_custom_call.1} parent=1 // pred_check_branch
      %10 = sbr.rel (0) target = $region5
    $region4: #{tpu_custom_call.1} parent=1 // pred_region
      _
    $region5: #{tpu_custom_call.1} parent=1 // pred_fallthru
      _
    // Predicated region
    $region6: #{tpu_custom_call.1} parent=1 // pred_check
      _
    $region7: #{tpu_custom_call.1} parent=1 // pred_check_branch
      %12 = sbr.rel (0) target = $region9
    $region8: #{tpu_custom_call.1} parent=1 // pred_region
      _
    $region9: #{tpu_custom_call.1} parent=1 // pred_fallthru
      _
    // Predicated region
    $region10: #{tpu_custom_call.1} parent=1 // pred_check
      _
    $region11: #{tpu_custom_call.1} parent=1 // pred_check_branch
      %14 = sbr.rel (0) target = $region13
    $region12: #{tpu_custom_call.1} parent=1 // pred_region
      _
    $region13: #{tpu_custom_call.1} parent=1 // pred_fallthru
      _
    %v15 = vld [vmem:[%s0] sm:$0x3]
    %v16 = vld [vmem:[%s1] sm:$0xff]
    %v17 = vld [vmem:[%s1 + $0x8] sm:$0xff]
    %v18 = vld [vmem:[%s1 + $0x10] sm:$0xff]
    %v19 = vld [vmem:[%s1 + $0x18] sm:$0xff]
    %v20 = vld [vmem:[%s2] sm:$0x1]
    %v22 = vlaneseq
    %v23 = vshrl.u32 %v22, 7
    %v24 = vsub.s32 0, %v23
    %v25 = vrot.slane %v20, %v24
    %vm27 = vcmask 261120
    %v29 = vsel %vm27, %v15, 0
    %31 = vmatprep.subr.mxu0 0.0
    %32 = vmatpush1.msra.mxu0 %v16
    %33 = vmatprep.subr.mxu0 0.0
    %34 = vmatpush1.msra.mxu0 %v17
    %35 = vmatprep.subr.mxu0 0.0
    %36 = vmatpush1.msra.mxu0 %v18
    %37 = vmatprep.subr.mxu0 0.0
    %38 = vmatpush1.msra.mxu0 %v19
    %39 = vmatprep.subr.mxu0 0.0
    %40 = vmatpush1.msra.mxu0 0.0
    %41 = vmatprep.subr.mxu0 0.0
    %42 = vmatpush1.msra.mxu0 0.0
    %43 = vmatprep.subr.mxu0 0.0
    %44 = vmatpush1.msra.mxu0 0.0
    %45 = vmatprep.subr.mxu0 0.0
    %46 = vmatpush1.msra.mxu0 0.0
    %47 = vmatprep.subr.mxu0 0.0
    %48 = vmatpush1.msra.mxu0 0.0
    %49 = vmatprep.subr.mxu0 0.0
    %50 = vmatpush1.msra.mxu0 0.0
    %51 = vmatprep.subr.mxu0 0.0
    %52 = vmatpush1.msra.mxu0 0.0
    %53 = vmatprep.subr.mxu0 0.0
    %54 = vmatpush1.msra.mxu0 0.0
    %55 = vmatprep.subr.mxu0 0.0
    %56 = vmatpush1.msra.mxu0 0.0
    %57 = vmatprep.subr.mxu0 0.0
    %58 = vmatpush1.msra.mxu0 0.0
    %59 = vmatprep.subr.mxu0 0.0
    %60 = vmatpush1.msra.mxu0 0.0
    %61 = vmatprep.subr.mxu0 0.0
    %62 = vmatpush1.msra.mxu0 0.0
    %63 = vmatprep.subr.mxu0 0.0
    %64 = vmatpush1.msra.mxu0 0.0
    %65 = vmatprep.subr.mxu0 0.0
    %66 = vmatpush1.msra.mxu0 0.0
    %67 = vmatprep.subr.mxu0 0.0
    %68 = vmatpush1.msra.mxu0 0.0
    %69 = vmatprep.subr.mxu0 0.0
    %70 = vmatpush1.msra.mxu0 0.0
    %71 = vmatprep.subr.mxu0 0.0
    %72 = vmatpush1.msra.mxu0 0.0
    %73 = vmatprep.subr.mxu0 0.0
    %74 = vmatpush1.msra.mxu0 0.0
    %75 = vmatprep.subr.mxu0 0.0
    %76 = vmatpush1.msra.mxu0 0.0
    %77 = vmatprep.subr.mxu0 0.0
    %78 = vmatpush1.msra.mxu0 0.0
    %79 = vmatprep.subr.mxu0 0.0
    %80 = vmatpush1.msra.mxu0 0.0
    %81 = vmatprep.subr.mxu0 0.0
    %82 = vmatpush1.msra.mxu0 0.0
    %83 = vmatprep.subr.mxu0 0.0
    %84 = vmatpush1.msra.mxu0 0.0
    %85 = vmatprep.subr.mxu0 0.0
    %86 = vmatpush1.msra.mxu0 0.0
    %87 = vmatprep.subr.mxu0 0.0
    %88 = vmatpush1.msra.mxu0 0.0
    %89 = vmatprep.subr.mxu0 0.0
    %90 = vmatpush1.msra.mxu0 0.0
    %91 = vmatprep.subr.mxu0 0.0
    %92 = vmatpush1.msra.mxu0 0.0
    %93 = vmatprep.subr.mxu0 0.0
    %94 = vmatpush1.msra.mxu0 0.0
    %95 = vmatprep.mubr.f32.mxu0 0.0
    %96 = vmatmul.mubr.f32.gmra.mrb[0].mxu0 %v29
    %v97 = vpop.f32.mrb[0].mxu0
    %v98 = vadd.f32 %v25, %v97
    %v99 = vpop.f32.mrb[0].mxu0
    %100 = vdwg.mxu0
    %vm101 = vcmask 9216
    %102 = vst.msk [vmem:[#allocation2] sm:$0x3] %vm101, %v98
    // Predicated region
    $region14: #{tpu_custom_call.1} parent=1 // pred_check
      _
    $region15: #{tpu_custom_call.1} parent=1 // pred_check_branch
      %104 = sbr.rel (0) target = $region17
    $region16: #{tpu_custom_call.1} parent=1 // pred_region
      %s106 = ssub.s32 32, 32
      %107 = vsyncadd [#allocation3], %s106
      %s109 = sshll.u32 [#allocation2], 4
      %s110 = int_to_ptr.vmem [resolvable:$true] %s109
      %112 = dma.vmem_to_hbm [thread:$0]  %s110, 32, %s3, [#allocation3]
    $region17: #{tpu_custom_call.1} parent=1 // pred_fallthru
      _
    // Predicated region
    $region18: #{tpu_custom_call.1} parent=1 // pred_check
      _
    $region19: #{tpu_custom_call.1} parent=1 // pred_check_branch
      %114 = sbr.rel (0) target = $region21
    $region20: #{tpu_custom_call.1} parent=1 // pred_region
      %115 = dma.done [#allocation3], 32
    $region21: #{tpu_custom_call.1} parent=1 // pred_fallthru
      _
    %116 = vsyncpa [#allocation3], 1

</llo_original>
